<compile_context>
chip_gen: v5e
topology: v5e:2x2
jax: 0.10.0
libtpu: 0.0.40
codegen_flags: <defaults>
</compile_context>

<pallas_src>
import functools

import jax
import jax.numpy as jnp
from jax.experimental import pallas as pl
from jax.experimental.pallas import tpu as pltpu


# --------------------------------------------------------------------------
# Pallas kernel (one batch slab per grid step)
# --------------------------------------------------------------------------
def _dyrelu_kernel(x_ref, w1_ref, b1_ref, w2_ref, b2_ref, o_ref,
                   *, oup, lambda_a, init_a, init_b):
    # x_ref/o_ref: (C, HW) in the I/O dtype (f32 or bf16).
    # w1: (SQ, C)  b1: (SQ, 1)  w2: (4*oup, SQ)  b2: (4*oup, 1)   (PyTorch layout, f32)
    x = x_ref[...]
    xf = x.astype(jnp.float32)

    # ---- AdaptiveAvgPool2d(1): mean over the fused spatial (lane) axis ----
    y = jnp.mean(xf, axis=-1, keepdims=True)                      # (C, 1)

    # ---- fc: Linear -> ReLU -> Linear -> h_sigmoid  (column form) ----
    h1 = jnp.dot(w1_ref[...], y, preferred_element_type=jnp.float32) + b1_ref[...]
    h1 = jnp.maximum(h1, 0.0)                                     # (SQ, 1)
    h2 = jnp.dot(w2_ref[...], h1, preferred_element_type=jnp.float32) + b2_ref[...]
    y2 = jnp.clip(h2 + 3.0, 0.0, 6.0) * (1.0 / 6.0)               # (4*oup, 1), h_sigmoid

    # ---- split along the sublane axis into per-channel coefficient columns ----
    a1 = (y2[0 * oup:1 * oup] - 0.5) * lambda_a + init_a[0]       # (oup, 1)
    bb1 = y2[1 * oup:2 * oup] - 0.5 + init_b[0]
    a2 = (y2[2 * oup:3 * oup] - 0.5) * lambda_a + init_a[1]
    bb2 = y2[3 * oup:4 * oup] - 0.5 + init_b[1]

    # ---- hot path: out = max(x*a1 + b1, x*a2 + b2), broadcast over lanes ----
    out = jnp.maximum(xf * a1 + bb1, xf * a2 + bb2)               # (C, HW)
    o_ref[...] = out.astype(o_ref.dtype)


# --------------------------------------------------------------------------
# Wrapper
# --------------------------------------------------------------------------
def dyrelu_pallas(x_nchw, fc1_w, fc1_b, fc2_w, fc2_b,
                  lambda_a=2.0, init_a=(1.0, 0.0), init_b=(0.0, 0.0)):
    """x_nchw: (B, C, H, W) f32 or bf16 (I/O dtype follows x).

    Weights in PyTorch nn.Linear layout:
      fc1_w: (SQ, C)   fc1_b: (SQ,)   fc2_w: (4*C, SQ)   fc2_b: (4*C,)
    """
    B, C, H, W = x_nchw.shape
    HW = H * W
    SQ, C_in = fc1_w.shape
    EXPC = fc2_w.shape[0]
    oup = EXPC // 4
    assert C_in == C and oup == C, "DYReLU here assumes inp == oup"

    x = x_nchw.reshape(B, C, HW)
    w1 = fc1_w.astype(jnp.float32)
    b1 = fc1_b.reshape(SQ, 1).astype(jnp.float32)
    w2 = fc2_w.astype(jnp.float32)
    b2 = fc2_b.reshape(EXPC, 1).astype(jnp.float32)

    kernel = functools.partial(
        _dyrelu_kernel, oup=oup, lambda_a=float(lambda_a),
        init_a=tuple(float(v) for v in init_a),
        init_b=tuple(float(v) for v in init_b))

    # Generation-aware VMEM limit (v7x: 64 MiB physical, v5e/v6e: 128 MiB).
    try:
        vmem_cap = int(pltpu.get_tpu_info().vmem_capacity_bytes)
    except Exception:
        vmem_cap = 64 << 20
    vmem_limit = int(min(100 << 20, max(32 << 20, vmem_cap - (16 << 20))))

    itemsize = jnp.dtype(x.dtype).itemsize
    cost = pl.CostEstimate(
        flops=6 * B * C * HW + 2 * B * (SQ * C + SQ * EXPC),
        transcendentals=0,
        bytes_accessed=2 * B * C * HW * itemsize
                       + 4 * (w1.size + b1.size + w2.size + b2.size),
    )

    out = pl.pallas_call(
        kernel,
        out_shape=jax.ShapeDtypeStruct((B, C, HW), x.dtype),
        grid=(B,),
        in_specs=[
            pl.BlockSpec((None, C, HW), lambda b: (b, 0, 0)),   # x: one batch slab/step
            pl.BlockSpec((SQ, C), lambda b: (0, 0)),            # fc1 weight (resident)
            pl.BlockSpec((SQ, 1), lambda b: (0, 0)),            # fc1 bias
            pl.BlockSpec((EXPC, SQ), lambda b: (0, 0)),         # fc2 weight
            pl.BlockSpec((EXPC, 1), lambda b: (0, 0)),          # fc2 bias
        ],
        out_specs=pl.BlockSpec((None, C, HW), lambda b: (b, 0, 0)),
        compiler_params=pltpu.CompilerParams(
            dimension_semantics=("parallel",),    # batch axis -> both TCs on v7x
            vmem_limit_bytes=vmem_limit,
        ),
        cost_estimate=cost,
    )(x, w1, b1, w2, b2)

    return out.reshape(B, C, H, W)


# --------------------------------------------------------------------------
# Pure-JAX reference (mirrors the PyTorch forward exactly)
# --------------------------------------------------------------------------
def dyrelu_ref(x, fc1_w, fc1_b, fc2_w, fc2_b,
               lambda_a=2.0, init_a=(1.0, 0.0), init_b=(0.0, 0.0)):
    B, C, H, W = x.shape
    y = x.mean(axis=(2, 3))                               # (B, C)
    y = jnp.maximum(y @ fc1_w.T + fc1_b, 0.0)             # Linear + ReLU
    y = y @ fc2_w.T + fc2_b                               # Linear
    y = jnp.clip(y + 3.0, 0.0, 6.0) / 6.0                 # h_sigmoid
    oup = C
    a1 = (y[:, :oup] - 0.5) * lambda_a + init_a[0]
    bb1 = y[:, oup:2 * oup] - 0.5 + init_b[0]
    a2 = (y[:, 2 * oup:3 * oup] - 0.5) * lambda_a + init_a[1]
    bb2 = y[:, 3 * oup:] - 0.5 + init_b[1]
    return jnp.maximum(x * a1[:, :, None, None] + bb1[:, :, None, None],
                       x * a2[:, :, None, None] + bb2[:, :, None, None])


# --------------------------------------------------------------------------
if __name__ == "__main__":
    # Module config: inp = oup = 8, reduction = 4 -> squeeze = 2,
    # K2=True, use_bias=True -> exp = 4 (fc out = 4 * oup = 32).
    B, C, H, W = 2, 8, 16, 16
    SQ = C // 4
    EXP = 4

    key = jax.random.PRNGKey(0)
    kx, kw1, kb1, kw2, kb2 = jax.random.split(key, 5)

    x = jax.random.normal(kx, (B, C, H, W), dtype=jnp.float32)
    # Deterministic synthetic weights in PyTorch nn.Linear (out, in) layout.
    fc1_w = jax.random.normal(kw1, (SQ, C), dtype=jnp.float32) * 0.3
    fc1_b = jax.random.normal(kb1, (SQ,), dtype=jnp.float32) * 0.1
    fc2_w = jax.random.normal(kw2, (EXP * C, SQ), dtype=jnp.float32) * 0.3
    fc2_b = jax.random.normal(kb2, (EXP * C,), dtype=jnp.float32) * 0.1

    # ---- f32 I/O path ----
    out = jax.block_until_ready(dyrelu_pallas(x, fc1_w, fc1_b, fc2_w, fc2_b))
    ref = dyrelu_ref(x, fc1_w, fc1_b, fc2_w, fc2_b)
    assert out.shape == (B, C, H, W)
    assert jnp.allclose(out, ref, atol=1e-4, rtol=1e-4), "f32 mismatch vs reference"

    # ---- bf16 HBM I/O path (halves memory traffic on the mem-bound hot path) ----
    x_bf16 = x.astype(jnp.bfloat16)
    out_bf16 = jax.block_until_ready(dyrelu_pallas(x_bf16, fc1_w, fc1_b, fc2_w, fc2_b))
    ref_bf16 = dyrelu_ref(x_bf16.astype(jnp.float32), fc1_w, fc1_b, fc2_w, fc2_b)
    assert out_bf16.dtype == jnp.bfloat16
    assert jnp.allclose(out_bf16.astype(jnp.float32), ref_bf16,
                        atol=3e-2, rtol=3e-2), "bf16 mismatch vs reference"

    print("KERNEL_OK")
</pallas_src>

<mosaic_0001>
module attributes {stable_mosaic.version = 11 : i64} {
  func.func @_dyrelu_kernel(%arg0: i32, %arg1: memref<1x8x256xf32, #tpu.memory_space<vmem>>, %arg2: memref<2x8xf32, #tpu.memory_space<vmem>>, %arg3: memref<2x1xf32, #tpu.memory_space<vmem>>, %arg4: memref<32x2xf32, #tpu.memory_space<vmem>>, %arg5: memref<32x1xf32, #tpu.memory_space<vmem>>, %arg6: memref<1x8x256xf32, #tpu.memory_space<vmem>>) attributes {dimension_semantics = [#tpu.dimension_semantics<parallel>], iteration_bounds = array<i64: 2>, scalar_prefetch = 0 : i64, scratch_operands = 0 : i64, tpu.core_type = #tpu.core_type<tc>, window_params = [{transform_indices = @transform_0, window_bounds = array<i64: 1, 8, 256>}, {pipeline_mode = #tpu.pipeline_mode<synchronous>, transform_indices = @transform_1, window_bounds = array<i64: 2, 8>}, {pipeline_mode = #tpu.pipeline_mode<synchronous>, transform_indices = @transform_2, window_bounds = array<i64: 2, 1>}, {pipeline_mode = #tpu.pipeline_mode<synchronous>, transform_indices = @transform_3, window_bounds = array<i64: 32, 2>}, {pipeline_mode = #tpu.pipeline_mode<synchronous>, transform_indices = @transform_4, window_bounds = array<i64: 32, 1>}, {transform_indices = @transform_5, window_bounds = array<i64: 1, 8, 256>}]} {
    %c0 = arith.constant 0 : index
    %c0_0 = arith.constant 0 : index
    %c0_1 = arith.constant 0 : index
    %0 = vector.load %arg1[%c0, %c0_0, %c0_1] : memref<1x8x256xf32, #tpu.memory_space<vmem>>, vector<1x8x256xf32>
    %1 = vector.shape_cast %0 : vector<1x8x256xf32> to vector<8x256xf32>
    %cst = arith.constant dense<0.000000e+00> : vector<8xf32>
    %2 = vector.multi_reduction <add>, %1, %cst [1] : vector<8x256xf32> to vector<8xf32>
    %3 = vector.shape_cast %2 : vector<8xf32> to vector<8x1xf32>
    %cst_2 = arith.constant 2.560000e+02 : f32
    %4 = vector.broadcast %cst_2 : f32 to vector<8x1xf32>
    %5 = arith.divf %3, %4 : vector<8x1xf32>
    %c0_3 = arith.constant 0 : index
    %c0_4 = arith.constant 0 : index
    %6 = vector.load %arg2[%c0_3, %c0_4] : memref<2x8xf32, #tpu.memory_space<vmem>>, vector<2x8xf32>
    %cst_5 = arith.constant dense<0.000000e+00> : vector<2x1xf32>
    %7 = tpu.matmul %6, %5, %cst_5 {dimension_numbers = #tpu.dot_dimension_numbers<[1], [0], [0], [1], [0, 0, 1, 1], [], []>} : vector<2x8xf32>, vector<8x1xf32>, vector<2x1xf32> -> vector<2x1xf32>
    %c0_6 = arith.constant 0 : index
    %c0_7 = arith.constant 0 : index
    %8 = vector.load %arg3[%c0_6, %c0_7] : memref<2x1xf32, #tpu.memory_space<vmem>>, vector<2x1xf32>
    %9 = arith.addf %7, %8 : vector<2x1xf32>
    %cst_8 = arith.constant 0.000000e+00 : f32
    %10 = vector.broadcast %cst_8 : f32 to vector<2x1xf32>
    %11 = arith.maximumf %9, %10 : vector<2x1xf32>
    %c0_9 = arith.constant 0 : index
    %c0_10 = arith.constant 0 : index
    %12 = vector.load %arg4[%c0_9, %c0_10] : memref<32x2xf32, #tpu.memory_space<vmem>>, vector<32x2xf32>
    %cst_11 = arith.constant dense<0.000000e+00> : vector<32x1xf32>
    %13 = tpu.matmul %12, %11, %cst_11 {dimension_numbers = #tpu.dot_dimension_numbers<[1], [0], [0], [1], [0, 0, 1, 1], [], []>} : vector<32x2xf32>, vector<2x1xf32>, vector<32x1xf32> -> vector<32x1xf32>
    %c0_12 = arith.constant 0 : index
    %c0_13 = arith.constant 0 : index
    %14 = vector.load %arg5[%c0_12, %c0_13] : memref<32x1xf32, #tpu.memory_space<vmem>>, vector<32x1xf32>
    %15 = arith.addf %13, %14 : vector<32x1xf32>
    %cst_14 = arith.constant 3.000000e+00 : f32
    %16 = vector.broadcast %cst_14 : f32 to vector<32x1xf32>
    %17 = arith.addf %15, %16 : vector<32x1xf32>
    %cst_15 = arith.constant 0.000000e+00 : f32
    %cst_16 = arith.constant 6.000000e+00 : f32
    %18 = vector.broadcast %cst_15 : f32 to vector<32x1xf32>
    %19 = arith.maximumf %18, %17 : vector<32x1xf32>
    %20 = vector.broadcast %cst_16 : f32 to vector<32x1xf32>
    %21 = arith.minimumf %20, %19 : vector<32x1xf32>
    %cst_17 = arith.constant 0.166666672 : f32
    %22 = vector.broadcast %cst_17 : f32 to vector<32x1xf32>
    %23 = arith.mulf %21, %22 : vector<32x1xf32>
    %24 = vector.extract_strided_slice %23 {offsets = [0, 0], sizes = [8, 1], strides = [1, 1]} : vector<32x1xf32> to vector<8x1xf32>
    %cst_18 = arith.constant 5.000000e-01 : f32
    %25 = vector.broadcast %cst_18 : f32 to vector<8x1xf32>
    %26 = arith.subf %24, %25 : vector<8x1xf32>
    %cst_19 = arith.constant 2.000000e+00 : f32
    %27 = vector.broadcast %cst_19 : f32 to vector<8x1xf32>
    %28 = arith.mulf %26, %27 : vector<8x1xf32>
    %cst_20 = arith.constant 1.000000e+00 : f32
    %29 = vector.broadcast %cst_20 : f32 to vector<8x1xf32>
    %30 = arith.addf %28, %29 : vector<8x1xf32>
    %31 = vector.extract_strided_slice %23 {offsets = [8, 0], sizes = [8, 1], strides = [1, 1]} : vector<32x1xf32> to vector<8x1xf32>
    %cst_21 = arith.constant 5.000000e-01 : f32
    %32 = vector.broadcast %cst_21 : f32 to vector<8x1xf32>
    %33 = arith.subf %31, %32 : vector<8x1xf32>
    %cst_22 = arith.constant 0.000000e+00 : f32
    %34 = vector.broadcast %cst_22 : f32 to vector<8x1xf32>
    %35 = arith.addf %33, %34 : vector<8x1xf32>
    %36 = vector.extract_strided_slice %23 {offsets = [16, 0], sizes = [8, 1], strides = [1, 1]} : vector<32x1xf32> to vector<8x1xf32>
    %cst_23 = arith.constant 5.000000e-01 : f32
    %37 = vector.broadcast %cst_23 : f32 to vector<8x1xf32>
    %38 = arith.subf %36, %37 : vector<8x1xf32>
    %cst_24 = arith.constant 2.000000e+00 : f32
    %39 = vector.broadcast %cst_24 : f32 to vector<8x1xf32>
    %40 = arith.mulf %38, %39 : vector<8x1xf32>
    %cst_25 = arith.constant 0.000000e+00 : f32
    %41 = vector.broadcast %cst_25 : f32 to vector<8x1xf32>
    %42 = arith.addf %40, %41 : vector<8x1xf32>
    %43 = vector.extract_strided_slice %23 {offsets = [24, 0], sizes = [8, 1], strides = [1, 1]} : vector<32x1xf32> to vector<8x1xf32>
    %cst_26 = arith.constant 5.000000e-01 : f32
    %44 = vector.broadcast %cst_26 : f32 to vector<8x1xf32>
    %45 = arith.subf %43, %44 : vector<8x1xf32>
    %cst_27 = arith.constant 0.000000e+00 : f32
    %46 = vector.broadcast %cst_27 : f32 to vector<8x1xf32>
    %47 = arith.addf %45, %46 : vector<8x1xf32>
    %48 = vector.broadcast %30 : vector<8x1xf32> to vector<8x256xf32>
    %49 = arith.mulf %1, %48 : vector<8x256xf32>
    %50 = vector.broadcast %35 : vector<8x1xf32> to vector<8x256xf32>
    %51 = arith.addf %49, %50 : vector<8x256xf32>
    %52 = vector.broadcast %42 : vector<8x1xf32> to vector<8x256xf32>
    %53 = arith.mulf %1, %52 : vector<8x256xf32>
    %54 = vector.broadcast %47 : vector<8x1xf32> to vector<8x256xf32>
    %55 = arith.addf %53, %54 : vector<8x256xf32>
    %56 = arith.maximumf %51, %55 : vector<8x256xf32>
    %c0_28 = arith.constant 0 : index
    %c0_29 = arith.constant 0 : index
    %c0_30 = arith.constant 0 : index
    %57 = vector.load %arg6[%c0_28, %c0_29, %c0_30] : memref<1x8x256xf32, #tpu.memory_space<vmem>>, vector<1x8x256xf32>
    %58 = vector.shape_cast %57 : vector<1x8x256xf32> to vector<8x256xf32>
    %59 = vector.shape_cast %56 : vector<8x256xf32> to vector<1x8x256xf32>
    tpu.vector_store %arg6[%c0_28, %c0_29, %c0_30], %59 {strides = array<i32>} : memref<1x8x256xf32, #tpu.memory_space<vmem>>, vector<1x8x256xf32>,
    return
  }
  func.func @transform_0(%arg0: i32) -> (i32, i32, i32) {
    %c0_i32 = arith.constant 0 : i32
    %c0_i32_0 = arith.constant 0 : i32
    %c0_i32_1 = arith.constant 0 : i32
    return %arg0, %c0_i32, %c0_i32_0 : i32, i32, i32
  }
  func.func @transform_1(%arg0: i32) -> (i32, i32) {
    %c0_i32 = arith.constant 0 : i32
    %c0_i32_0 = arith.constant 0 : i32
    %c0_i32_1 = arith.constant 0 : i32
    return %c0_i32, %c0_i32_0 : i32, i32
  }
  func.func @transform_2(%arg0: i32) -> (i32, i32) {
    %c0_i32 = arith.constant 0 : i32
    %c0_i32_0 = arith.constant 0 : i32
    %c0_i32_1 = arith.constant 0 : i32
    return %c0_i32, %c0_i32_0 : i32, i32
  }
  func.func @transform_3(%arg0: i32) -> (i32, i32) {
    %c0_i32 = arith.constant 0 : i32
    %c0_i32_0 = arith.constant 0 : i32
    %c0_i32_1 = arith.constant 0 : i32
    return %c0_i32, %c0_i32_0 : i32, i32
  }
  func.func @transform_4(%arg0: i32) -> (i32, i32) {
    %c0_i32 = arith.constant 0 : i32
    %c0_i32_0 = arith.constant 0 : i32
    %c0_i32_1 = arith.constant 0 : i32
    return %c0_i32, %c0_i32_0 : i32, i32
  }
  func.func @transform_5(%arg0: i32) -> (i32, i32, i32) {
    %c0_i32 = arith.constant 0 : i32
    %c0_i32_0 = arith.constant 0 : i32
    %c0_i32_1 = arith.constant 0 : i32
    return %arg0, %c0_i32, %c0_i32_0 : i32, i32, i32
  }
}

</mosaic_0001>

<llo_original>
// kernel: tpu_custom_call.1
$region0: #{tpu_custom_call.1}
  #allocation0 [shape = 'u32[]', space=smem, size = 0x4, offset = 0x4, fixed_abs, tag = 'smem constant byte address 0x4 - core index']
  #allocation1 [shape = 'u32[72,128]{1,0:T(1,128)}', space=vmem, size = 0x9000, scoped, tag = 'internal scratch']
  %s0 = inlined_call_operand.vmem [shape: f32[2,8,256], index: 0, kind: input, shape index: {}]
  %s1 = inlined_call_operand.vmem [shape: f32[2,8], index: 1, kind: input, shape index: {}]
  %s2 = inlined_call_operand.vmem [shape: f32[2,1], index: 2, kind: input, shape index: {}]
  %s3 = inlined_call_operand.vmem [shape: f32[32,2], index: 3, kind: input, shape index: {}]
  %s4 = inlined_call_operand.vmem [shape: f32[32,1], index: 4, kind: input, shape index: {}]
  %s5 = inlined_call_operand.hbm [shape: f32[2,8,256], index: 5, kind: output, shape index: {}]
  %s6 = sld [smem:[#allocation0]]
  $region53: #{tpu_custom_call.1} parent=0
    _
  %s8 = ssub.s32 1, %s6
  %s9 = scalar_select 0, %s8, %s6
  $region1: #{tpu_custom_call.1} parent=0
    #allocation2 [shape = 'u8[16384]{0}', space=vmem, size = 0x4000, scoped, tag = 'output window, operand 0']
    #allocation3 [shape = 's32[2]{0}', space=sflag, size = 0x8, scoped, tag = 'scoped memory for tpu_custom_call.1']
    %10 = vsyncpa [#allocation3], 0
    %s11 = scalar_lea.sflag [#allocation3], 1
    %12 = vsyncpa %s11, 0
    loop: start=0, step=1, limit=4
    $region2: #{tpu_custom_call.1} parent=1 // loop_pre_header
      _
    $region3: #{tpu_custom_call.1} parent=1 // loop_header
      %s14 = sphi 0, %s18
      %p15 = scmp.ge.s32.totalorder %s14, 4
      %s24 = sphi 0, %s26
      %s27 = sphi 0, %s24
      %s28 = sphi 0, %s27
      %s44 = sphi 0, %s28
      %s48 = sphi 0, %s48
      %s50 = sphi 0, %s48
      %s51 = sphi 0, %s50
      %s65 = sphi 0, %s51
      %s69 = sphi 0, %s69
      %s71 = sphi 0, %s69
      %s72 = sphi 0, %s71
      %s86 = sphi 0, %s72
      %s90 = sphi 0, %s90
      %s92 = sphi 0, %s90
      %s93 = sphi 0, %s92
      %s107 = sphi 0, %s93
      %s111 = sphi 0, %s111
      %s113 = sphi 0, %s111
      %s114 = sphi 0, %s113
      %s128 = sphi 0, %s114
      %s134 = sphi 0, %s136
      %s137 = sphi 0, %s134
      %s138 = sphi 0, %s137
      %s154 = sphi 0, %s138
    $region4: #{tpu_custom_call.1} parent=1 // loop_header_branch
      %17 = sbr.rel (%p15) target = $region8
    $region5: #{tpu_custom_call.1} parent=1 // loop_body
      %s19 = ssub.s32 %s14, 1
      %s20 = ssub.s32 %s14, 2
      %s21 = sadd.s32 %s14, 1
      %s22 = ssub.s32 %s14, %s21
      %p23 = scmp.eq.s32.totalorder %s22, 0
      %s25 = sadd.s32 %s24, 1
      %s26 = scalar_select %p23, %s24, %s25
      %p29 = pneg %p23
      %p30 = scmp.eq.s32.totalorder %s14, 1
      %p31 = por %p29, %p30
      %p32 = scmp.ne.s32.totalorder %s24, %s27
      %p33 = scmp.eq.s32.totalorder %s14, 0
      %p34 = por %p32, %p33
      %p35 = scmp.ne.s32.totalorder %s24, %s27
      %p36 = scmp.eq.s32.totalorder %s19, 1
      %p37 = por %p35, %p36
      %p38 = scmp.ne.s32.totalorder %s27, %s28
      %p39 = scmp.eq.s32.totalorder %s19, 0
      %p40 = por %p38, %p39
      %p41 = scmp.ne.s32.totalorder %s27, %s28
      %p42 = scmp.eq.s32.totalorder %s20, 1
      %p43 = por %p41, %p42
      %p45 = scmp.ne.s32.totalorder %s28, %s44
      %p46 = scmp.eq.s32.totalorder %s20, 0
      %p47 = por %p45, %p46
      %s49 = sadd.s32 %s48, 1
      %p52 = scmp.eq.s32.totalorder %s14, 1
      %p53 = scmp.ne.s32.totalorder %s48, %s50
      %p54 = scmp.eq.s32.totalorder %s14, 0
      %p55 = por %p53, %p54
      %p56 = scmp.ne.s32.totalorder %s48, %s50
      %p57 = scmp.eq.s32.totalorder %s19, 1
      %p58 = por %p56, %p57
      %p59 = scmp.ne.s32.totalorder %s50, %s51
      %p60 = scmp.eq.s32.totalorder %s19, 0
      %p61 = por %p59, %p60
      %p62 = scmp.ne.s32.totalorder %s50, %s51
      %p63 = scmp.eq.s32.totalorder %s20, 1
      %p64 = por %p62, %p63
      %p66 = scmp.ne.s32.totalorder %s51, %s65
      %p67 = scmp.eq.s32.totalorder %s20, 0
      %p68 = por %p66, %p67
      %s70 = sadd.s32 %s69, 1
      %p73 = scmp.eq.s32.totalorder %s14, 1
      %p74 = scmp.ne.s32.totalorder %s69, %s71
      %p75 = scmp.eq.s32.totalorder %s14, 0
      %p76 = por %p74, %p75
      %p77 = scmp.ne.s32.totalorder %s69, %s71
      %p78 = scmp.eq.s32.totalorder %s19, 1
      %p79 = por %p77, %p78
      %p80 = scmp.ne.s32.totalorder %s71, %s72
      %p81 = scmp.eq.s32.totalorder %s19, 0
      %p82 = por %p80, %p81
      %p83 = scmp.ne.s32.totalorder %s71, %s72
      %p84 = scmp.eq.s32.totalorder %s20, 1
      %p85 = por %p83, %p84
      %p87 = scmp.ne.s32.totalorder %s72, %s86
      %p88 = scmp.eq.s32.totalorder %s20, 0
      %p89 = por %p87, %p88
      %s91 = sadd.s32 %s90, 1
      %p94 = scmp.eq.s32.totalorder %s14, 1
      %p95 = scmp.ne.s32.totalorder %s90, %s92
      %p96 = scmp.eq.s32.totalorder %s14, 0
      %p97 = por %p95, %p96
      %p98 = scmp.ne.s32.totalorder %s90, %s92
      %p99 = scmp.eq.s32.totalorder %s19, 1
      %p100 = por %p98, %p99
      %p101 = scmp.ne.s32.totalorder %s92, %s93
      %p102 = scmp.eq.s32.totalorder %s19, 0
      %p103 = por %p101, %p102
      %p104 = scmp.ne.s32.totalorder %s92, %s93
      %p105 = scmp.eq.s32.totalorder %s20, 1
      %p106 = por %p104, %p105
      %p108 = scmp.ne.s32.totalorder %s93, %s107
      %p109 = scmp.eq.s32.totalorder %s20, 0
      %p110 = por %p108, %p109
      %s112 = sadd.s32 %s111, 1
      %p115 = scmp.eq.s32.totalorder %s14, 1
      %p116 = scmp.ne.s32.totalorder %s111, %s113
      %p117 = scmp.eq.s32.totalorder %s14, 0
      %p118 = por %p116, %p117
      %p119 = scmp.ne.s32.totalorder %s111, %s113
      %p120 = scmp.eq.s32.totalorder %s19, 1
      %p121 = por %p119, %p120
      %p122 = scmp.ne.s32.totalorder %s113, %s114
      %p123 = scmp.eq.s32.totalorder %s19, 0
      %p124 = por %p122, %p123
      %p125 = scmp.ne.s32.totalorder %s113, %s114
      %p126 = scmp.eq.s32.totalorder %s20, 1
      %p127 = por %p125, %p126
      %p129 = scmp.ne.s32.totalorder %s114, %s128
      %p130 = scmp.eq.s32.totalorder %s20, 0
      %p131 = por %p129, %p130
      %s132 = ssub.s32 %s14, %s21
      %p133 = scmp.eq.s32.totalorder %s132, 0
      %s135 = sadd.s32 %s134, 1
      %s136 = scalar_select %p133, %s134, %s135
      %p139 = pneg %p133
      %p140 = scmp.eq.s32.totalorder %s14, 1
      %p141 = por %p139, %p140
      %p142 = scmp.ne.s32.totalorder %s134, %s137
      %p143 = scmp.eq.s32.totalorder %s14, 0
      %p144 = por %p142, %p143
      %p145 = scmp.ne.s32.totalorder %s134, %s137
      %p146 = scmp.eq.s32.totalorder %s19, 1
      %p147 = por %p145, %p146
      %p148 = scmp.ne.s32.totalorder %s137, %s138
      %p149 = scmp.eq.s32.totalorder %s19, 0
      %p150 = por %p148, %p149
      %p151 = scmp.ne.s32.totalorder %s137, %s138
      %p152 = scmp.eq.s32.totalorder %s20, 1
      %p153 = por %p151, %p152
      %p155 = scmp.ne.s32.totalorder %s138, %s154
      %p156 = scmp.eq.s32.totalorder %s20, 0
      %p157 = por %p155, %p156
      %p158 = scmp.le.s32.totalorder 1, %s14
      %p159 = scmp.lt.s32.totalorder %s14, 3
      %p160 = pnand %p158, %p159
      %p161 = pneg %p160
      // Predicated region
      $region9: #{tpu_custom_call.1} parent=5 // pred_check
        _
      $region10: #{tpu_custom_call.1} parent=5 // pred_check_branch
        %163 = sbr.rel (%p160) target = $region12
      $region11: #{tpu_custom_call.1} parent=5 // pred_region
        %s164 = ssub.s32 %s14, 1
        // Predicated region
        $region13: #{tpu_custom_call.1} parent=11 // pred_check
          %p165 = pneg %p61
        $region14: #{tpu_custom_call.1} parent=11 // pred_check_branch
          %167 = sbr.rel (%p165) target = $region16
        $region15: #{tpu_custom_call.1} parent=11 // pred_region
          _
        $region16: #{tpu_custom_call.1} parent=11 // pred_fallthru
          _
        // Predicated region
        $region17: #{tpu_custom_call.1} parent=11 // pred_check
          %p168 = pneg %p82
        $region18: #{tpu_custom_call.1} parent=11 // pred_check_branch
          %170 = sbr.rel (%p168) target = $region20
        $region19: #{tpu_custom_call.1} parent=11 // pred_region
          _
        $region20: #{tpu_custom_call.1} parent=11 // pred_fallthru
          _
        // Predicated region
        $region21: #{tpu_custom_call.1} parent=11 // pred_check
          %p171 = pneg %p103
        $region22: #{tpu_custom_call.1} parent=11 // pred_check_branch
          %173 = sbr.rel (%p171) target = $region24
        $region23: #{tpu_custom_call.1} parent=11 // pred_region
          _
        $region24: #{tpu_custom_call.1} parent=11 // pred_fallthru
          _
        // Predicated region
        $region25: #{tpu_custom_call.1} parent=11 // pred_check
          %p174 = pneg %p124
        $region26: #{tpu_custom_call.1} parent=11 // pred_check_branch
          %176 = sbr.rel (%p174) target = $region28
        $region27: #{tpu_custom_call.1} parent=11 // pred_region
          _
        $region28: #{tpu_custom_call.1} parent=11 // pred_fallthru
          _
      $region12: #{tpu_custom_call.1} parent=5 // pred_fallthru
        _
      %p177 = scmp.lt.s32.totalorder %s14, 2
      // Predicated region
      $region29: #{tpu_custom_call.1} parent=5 // pred_check
        %p178 = pneg %p177
      $region30: #{tpu_custom_call.1} parent=5 // pred_check_branch
        %180 = sbr.rel (%p178) target = $region32
      $region31: #{tpu_custom_call.1} parent=5 // pred_region
        // Predicated region
        $region33: #{tpu_custom_call.1} parent=31 // pred_check
          %p181 = pneg %p34
        $region34: #{tpu_custom_call.1} parent=31 // pred_check_branch
          %183 = sbr.rel (%p181) target = $region36
        $region35: #{tpu_custom_call.1} parent=31 // pred_region
          %p184 = scmp.lt.s32.totalorder %s14, 1
          %s185 = scalar_select %p184, %s14, 1
          %s186 = smul.addr %s185, 2
          %s187 = smul.addr %s186, 8
          %s188 = scalar_lea.vmem %s0, %s187
        $region36: #{tpu_custom_call.1} parent=31 // pred_fallthru
          _
      $region32: #{tpu_custom_call.1} parent=5 // pred_fallthru
        _
      %p189 = scmp.le.s32.totalorder 1, %s14
      %p190 = scmp.lt.s32.totalorder %s14, 3
      %p191 = pnand %p189, %p190
      %p192 = pneg %p191
      // Predicated region
      $region37: #{tpu_custom_call.1} parent=5 // pred_check
        _
      $region38: #{tpu_custom_call.1} parent=5 // pred_check_branch
        %194 = sbr.rel (%p191) target = $region40
      $region39: #{tpu_custom_call.1} parent=5 // pred_region
        %s195 = ssub.s32 %s14, 1
        %p196 = scmp.lt.s32.totalorder %s19, 1
        %s197 = scalar_select %p196, %s19, 1
        %s198 = smul.addr %s197, 2
        %s199 = smul.addr %s198, 8
        %s200 = scalar_lea.vmem %s0, %s199
        %p201 = pneg %p40
        %p202 = pneg %p37
        %p203 = pneg %p61
        %p204 = pneg %p58
        %p205 = pneg %p82
        %p206 = pneg %p79
        %p207 = pneg %p103
        %p208 = pneg %p100
        %p209 = pneg %p124
        %p210 = pneg %p121
        %p211 = pneg %p150
        %p212 = pneg %p147
        %s213 = sand.u32 %s137, 1
        %s214 = scalar_lea.sflag [#allocation3], %s213
        %s215 = sand.u32 %s137, 1
        %s216 = smul.addr %s215, 16
        %s217 = scalar_lea.vmem [#allocation2], %s216
        %p218 = scmp.lt.s32.totalorder %s19, 1
        %s219 = scalar_select %p218, %s19, 1
        %s220 = smul.addr %s219, 2
        %s221 = smul.addr %s220, 8
        %s222 = scalar_lea.vmem %s0, %s221
        %v223 = vld [vmem:[%s222] sm:$0xff]
        %v224 = vld [vmem:[%s222 + $0x8] sm:$0xff]
        %v225 = vadd.f32 %v223, %v224
        %226 = vadd.xlane.f32.xlu0 %v225
        %v227 = vpop.xlane.xlu0 %226
        %v228 = vrcp.pop 256.0
        %v229 = vmul.f32 256.0, %v228
        %v230 = vsub.f32 1.0, %v229
        %v231 = vmul.f32 %v228, %v230
        %v232 = vadd.f32 %v228, %v231
        %vm233 = vweird.f32 %v228
        %v234 = vsel %vm233, %v228, %v232
        %v235 = vmul.f32 %v227, %v234
        %v236 = vld [vmem:[%s1] sm:$0x3]
        %v237 = vld [vmem:[%s2] sm:$0x3]
        %vm238 = vcmask 64512
        %v240 = vsel %vm238, %v236, 0
        %242 = vmatpush.msra.mxu0 0.0
        %243 = vmatpush.msra.mxu0 0.0
        %244 = vmatpush.msra.mxu0 0.0
        %245 = vmatpush.msra.mxu0 0.0
        %246 = vmatpush.msra.mxu0 0.0
        %247 = vmatpush.msra.mxu0 0.0
        %248 = vmatpush.msra.mxu0 0.0
        %249 = vmatpush.msra.mxu0 0.0
        %250 = vmatpush.msra.mxu0 0.0
        %251 = vmatpush.msra.mxu0 0.0
        %252 = vmatpush.msra.mxu0 0.0
        %253 = vmatpush.msra.mxu0 0.0
        %254 = vmatpush.msra.mxu0 0.0
        %255 = vmatpush.msra.mxu0 0.0
        %256 = vmatpush.msra.mxu0 0.0
        %257 = vmatpush.msra.mxu0 %v235
        %258 = vmatmul.f32.gmra.mxu0 %v240
        %v259 = vpop.f32.mrf.mxu0
        %v260 = vadd.f32 %v237, %v259
        %261 = vdwg.mxu0
        %v262 = vmax.f32 %v260, 0.0
        %v263 = vld [vmem:[%s3] sm:$0xff]
        %v264 = vld [vmem:[%s3 + $0x8] sm:$0xff]
        %v265 = vld [vmem:[%s3 + $0x10] sm:$0xff]
        %v266 = vld [vmem:[%s3 + $0x18] sm:$0xff]
        %v267 = vld [vmem:[%s4] sm:$0xff]
        %v268 = vld [vmem:[%s4 + $0x8] sm:$0xff]
        %v269 = vld [vmem:[%s4 + $0x10] sm:$0xff]
        %v270 = vld [vmem:[%s4 + $0x18] sm:$0xff]
        %vm271 = vcmask 15360
        %v273 = vsel %vm271, %v263, 0
        %v276 = vsel %vm271, %v264, 0
        %v279 = vsel %vm271, %v265, 0
        %v282 = vsel %vm271, %v266, 0
        %vm284 = vcmask 1041408
        %v286 = vsel %vm284, %v262, 0
        %288 = vmatpush.msra.mxu0 0.0
        %289 = vmatpush.msra.mxu0 0.0
        %290 = vmatpush.msra.mxu0 0.0
        %291 = vmatpush.msra.mxu0 0.0
        %292 = vmatpush.msra.mxu0 0.0
        %293 = vmatpush.msra.mxu0 0.0
        %294 = vmatpush.msra.mxu0 0.0
        %295 = vmatpush.msra.mxu0 0.0
        %296 = vmatpush.msra.mxu0 0.0
        %297 = vmatpush.msra.mxu0 0.0
        %298 = vmatpush.msra.mxu0 0.0
        %299 = vmatpush.msra.mxu0 0.0
        %300 = vmatpush.msra.mxu0 0.0
        %301 = vmatpush.msra.mxu0 0.0
        %302 = vmatpush.msra.mxu0 0.0
        %303 = vmatpush.msra.mxu0 %v286
        %304 = vmatmul.f32.gmra.mxu0 %v273
        %v305 = vpop.f32.mrf.mxu0
        %v306 = vadd.f32 %v267, %v305
        %307 = vmatmul.f32.gmra.mxu0 %v276
        %v308 = vpop.f32.mrf.mxu0
        %v309 = vadd.f32 %v268, %v308
        %310 = vmatmul.f32.gmra.mxu0 %v279
        %v311 = vpop.f32.mrf.mxu0
        %v312 = vadd.f32 %v269, %v311
        %313 = vmatmul.f32.gmra.mxu0 %v282
        %v314 = vpop.f32.mrf.mxu0
        %v315 = vadd.f32 %v270, %v314
        %316 = vdwg.mxu0
        %v317 = vadd.f32 %v306, 3.0
        %v318 = vadd.f32 %v309, 3.0
        %v319 = vadd.f32 %v312, 3.0
        %v320 = vadd.f32 %v315, 3.0
        %v321 = vmax.f32 %v317, 0.0
        %v322 = vmax.f32 %v318, 0.0
        %v323 = vmax.f32 %v319, 0.0
        %v324 = vmax.f32 %v320, 0.0
        %v325 = vmin.f32 %v321, 6.0
        %v326 = vmin.f32 %v322, 6.0
        %v327 = vmin.f32 %v323, 6.0
        %v328 = vmin.f32 %v324, 6.0
        %v329 = vmul.f32 %v325, 0.16666667
        %v330 = vmul.f32 %v326, 0.16666667
        %v331 = vmul.f32 %v327, 0.16666667
        %v332 = vmul.f32 %v328, 0.16666667
        %v333 = vsub.f32 %v329, 0.5
        %v334 = vmul.f32 %v333, 2.0
        %v335 = vadd.f32 %v334, 1.0
        %v336 = vsub.f32 %v330, 0.5
        %v337 = vadd.f32 %v336, 0.0
        %v338 = vsub.f32 %v331, 0.5
        %v339 = vmul.f32 %v338, 2.0
        %v340 = vadd.f32 %v339, 0.0
        %v341 = vsub.f32 %v332, 0.5
        %v342 = vadd.f32 %v341, 0.0
        %344 = vset.pattern.permute.xlu0 0
        %345 = vperm.xlu0 %344, %v335
        %v346 = vpop.permute.xlu0 %345
        %v348 = vmul.f32 %v223, %v346
        %v349 = vmul.f32 %v224, %v346
        %351 = vset.pattern.permute.xlu0 0
        %352 = vperm.xlu0 %351, %v337
        %v353 = vpop.permute.xlu0 %352
        %v355 = vadd.f32 %v348, %v353
        %v356 = vadd.f32 %v349, %v353
        %358 = vset.pattern.permute.xlu0 0
        %359 = vperm.xlu0 %358, %v340
        %v360 = vpop.permute.xlu0 %359
        %v362 = vmul.f32 %v223, %v360
        %v363 = vmul.f32 %v224, %v360
        %365 = vset.pattern.permute.xlu0 0
        %366 = vperm.xlu0 %365, %v342
        %v367 = vpop.permute.xlu0 %366
        %v369 = vadd.f32 %v362, %v367
        %v370 = vadd.f32 %v363, %v367
        %v371 = vmax.f32 %v355, %v369
        %v372 = vmax.f32 %v356, %v370
        %373 = vst [vmem:[%s217] sm:$0xff] %v371
        %374 = vst [vmem:[%s217 + $0x8] sm:$0xff] %v372
        %s375 = sand.u32 %s137, 1
        %s376 = scalar_lea.sflag [#allocation3], %s375
        %s377 = sand.u32 %s137, 1
        %s378 = smul.addr %s377, 16
        %s379 = scalar_lea.vmem [#allocation2], %s378
        // Predicated region
        $region41: #{tpu_custom_call.1} parent=39 // pred_check
          %p380 = pneg %p147
        $region42: #{tpu_custom_call.1} parent=39 // pred_check_branch
          %382 = sbr.rel (%p380) target = $region44
        $region43: #{tpu_custom_call.1} parent=39 // pred_region
          %384 = vsyncadd %s376, 0
          %s385 = smul.addr %s19, 2
          %s386 = smul.addr %s385, 8
          %s387 = scalar_lea.hbm %s5, %s386
          %s389 = sshll.u32 %s379, 4
          %s390 = int_to_ptr.vmem [resolvable:$true] %s389
          %s391 = sshll.u32 %s387, 4
          %s392 = int_to_ptr.hbm [resolvable:$true] %s391
          %394 = dma.vmem_to_hbm [thread:$0]  %s390, 256, %s392, %s376
        $region44: #{tpu_custom_call.1} parent=39 // pred_fallthru
          _
      $region40: #{tpu_custom_call.1} parent=5 // pred_fallthru
        _
      %p395 = scmp.le.s32.totalorder 2, %s14
      // Predicated region
      $region45: #{tpu_custom_call.1} parent=5 // pred_check
        %p396 = pneg %p395
      $region46: #{tpu_custom_call.1} parent=5 // pred_check_branch
        %398 = sbr.rel (%p396) target = $region48
      $region47: #{tpu_custom_call.1} parent=5 // pred_region
        %s399 = ssub.s32 %s14, 2
        // Predicated region
        $region49: #{tpu_custom_call.1} parent=47 // pred_check
          %p400 = pneg %p153
        $region50: #{tpu_custom_call.1} parent=47 // pred_check_branch
          %402 = sbr.rel (%p400) target = $region52
        $region51: #{tpu_custom_call.1} parent=47 // pred_region
          %s403 = sand.u32 %s138, 1
          %s404 = scalar_lea.sflag [#allocation3], %s403
          %s405 = sand.u32 %s138, 1
          %s406 = smul.addr %s405, 16
          %s407 = scalar_lea.vmem [#allocation2], %s406
          %409 = dma.done %s404, 256
        $region52: #{tpu_custom_call.1} parent=47 // pred_fallthru
          _
      $region48: #{tpu_custom_call.1} parent=5 // pred_fallthru
        _
    $region6: #{tpu_custom_call.1} parent=1 // loop_footer
      %s18 = sadd.s32 1, %s14
    $region7: #{tpu_custom_call.1} parent=1 // loop_footer_branch
      %13 = sbr.rel target = $region3
    $region8: #{tpu_custom_call.1} parent=1 // loop_exit
      _
    %410 = vsyncpa [#allocation3], 1
    %s411 = scalar_lea.sflag [#allocation3], 1
    %412 = vsyncpa %s411, 1

</llo_original>
